<compile_context>
chip_gen: v5e
topology: v5e:2x2
jax: 0.10.0
libtpu: 0.0.40
codegen_flags: <defaults>
</compile_context>

<pallas_src>
import functools

import jax
import jax.numpy as jnp
from jax.experimental import pallas as pl
from jax.experimental.pallas import tpu as pltpu


def _attention_kernel_batched(enc_ref, dec_ref, ct_ref):
    """Whole batch in one grid step. enc:(B,Se,D) dec:(B,Sd,D) ct:(B,Sd,D)."""
    enc = enc_ref[...]
    dec = dec_ref[...]

    # s[b,q,k] = <dec[b,q,:], enc[b,k,:]>  ==  a_t.permute(0,2,1) in torch.
    s = jnp.einsum("bqd,bkd->bqk", dec, enc,
                   preferred_element_type=jnp.float32)           # (B, Sd, Se) f32

    # softmax over the encoder axis (== dim=1 of torch's a_t), kept in f32.
    m = jnp.max(s, axis=-1, keepdims=True)
    e = jnp.exp(s - m)
    a = e * pl.reciprocal(jnp.sum(e, axis=-1, keepdims=True), approx=True)

    # c_t[b,q,d] = sum_k a[b,q,k] * enc[b,k,d]  ==  bmm(a_t^T, enc).
    ct = jnp.einsum("bqk,bkd->bqd", a.astype(enc.dtype), enc,
                    preferred_element_type=jnp.float32)
    ct_ref[...] = ct.astype(ct_ref.dtype)


def _attention_kernel_per_batch(enc_ref, dec_ref, ct_ref):
    """One batch element per grid step. enc:(Se,D) dec:(Sd,D) ct:(Sd,D)."""
    enc = enc_ref[...]
    dec = dec_ref[...]

    s = jnp.einsum("qd,kd->qk", dec, enc,
                   preferred_element_type=jnp.float32)            # (Sd, Se) f32
    m = jnp.max(s, axis=-1, keepdims=True)
    e = jnp.exp(s - m)
    a = e * pl.reciprocal(jnp.sum(e, axis=-1, keepdims=True), approx=True)

    ct = jnp.einsum("qk,kd->qd", a.astype(enc.dtype), enc,
                    preferred_element_type=jnp.float32)
    ct_ref[...] = ct.astype(ct_ref.dtype)


def _multi_tensorcore_device() -> bool:
    """Best-effort: does one device expose >1 TensorCore (v4/v5p megacore, v7x)?"""
    try:
        info = pltpu.get_tpu_info()
        for attr in ("num_cores", "core_count", "num_tensorcores",
                     "tensor_core_count", "cores_per_chip"):
            v = getattr(info, attr, None)
            if isinstance(v, int) and v > 0:
                return v > 1
    except Exception:
        pass
    try:
        kind = jax.devices()[0].device_kind.lower()
        return ("v4" in kind) or ("v5p" in kind) or ("7" in kind)
    except Exception:
        return False


@functools.partial(jax.jit, static_argnums=(2,))
def _attention_impl(enc_output, dec_output, batch_parallel):
    B, Se, D = enc_output.shape
    Bd, Sd, Dd = dec_output.shape
    assert B == Bd and D == Dd, "batch / feature dims must match"

    out_dtype = jnp.promote_types(enc_output.dtype, dec_output.dtype)
    out_shape = jax.ShapeDtypeStruct((B, Sd, D), out_dtype)

    if batch_parallel:
        # Shard the batch across TensorCores (v7x / megacore chips).
        return pl.pallas_call(
            _attention_kernel_per_batch,
            out_shape=out_shape,
            grid=(B,),
            in_specs=[pl.BlockSpec((None, Se, D), lambda b: (b, 0, 0)),
                      pl.BlockSpec((None, Sd, D), lambda b: (b, 0, 0))],
            out_specs=pl.BlockSpec((None, Sd, D), lambda b: (b, 0, 0)),
            compiler_params=pltpu.CompilerParams(
                dimension_semantics=("parallel",)),
        )(enc_output, dec_output)

    # Single call, no grid: avoids per-step pipeline overhead on 1-TC chips.
    vmem = pl.BlockSpec(memory_space=pltpu.MemorySpace.VMEM)
    return pl.pallas_call(
        _attention_kernel_batched,
        out_shape=out_shape,
        in_specs=[vmem, vmem],
        out_specs=vmem,
    )(enc_output, dec_output)


def attention(enc_output, dec_output, batch_parallel=None):
    """c_t = bmm(softmax(bmm(enc, dec^T), dim=1)^T, enc), per batch."""
    if batch_parallel is None:
        batch_parallel = _multi_tensorcore_device()
    return _attention_impl(enc_output, dec_output, bool(batch_parallel))


def attention_ref(enc_output, dec_output):
    """Pure-JAX reference in the exact PyTorch orientation (softmax dim=1)."""
    a_t = jnp.einsum("bid,bjd->bij", enc_output, dec_output)   # (B, Se, Sd)
    a_t = jax.nn.softmax(a_t, axis=1)                          # softmax over Se
    return jnp.einsum("bij,bid->bjd", a_t, enc_output)         # (B, Sd, D)


if __name__ == "__main__":
    B, Se, Sd, hidden = 2, 8, 8, 32
    D = 2 * hidden          # encoder feature dim (bi-GRU => 2*hidden) = 64

    key = jax.random.PRNGKey(0)
    k_enc, k_dec = jax.random.split(key)
    enc_f32 = jax.random.normal(k_enc, (B, Se, D), dtype=jnp.float32)
    dec_f32 = jax.random.normal(k_dec, (B, Sd, D), dtype=jnp.float32)

    # --- f32 inputs, single-call structure (v5e/v6e path) ---
    ref_f32 = attention_ref(enc_f32, dec_f32)
    out_f32 = attention(enc_f32, dec_f32, batch_parallel=False)
    jax.block_until_ready(out_f32)
    assert out_f32.shape == (B, Sd, D) and out_f32.dtype == jnp.float32
    err_f32 = float(jnp.max(jnp.abs(out_f32 - ref_f32)))
    assert jnp.allclose(out_f32, ref_f32, atol=2e-2, rtol=2e-2), err_f32

    # --- bf16 inputs (halved HBM traffic, bf16 MXU), batch-parallel grid ---
    enc_bf16 = enc_f32.astype(jnp.bfloat16)
    dec_bf16 = dec_f32.astype(jnp.bfloat16)
    ref_bf16 = attention_ref(enc_bf16.astype(jnp.float32),
                             dec_bf16.astype(jnp.float32))
    out_bf16 = attention(enc_bf16, dec_bf16, batch_parallel=True)
    jax.block_until_ready(out_bf16)
    assert out_bf16.shape == (B, Sd, D) and out_bf16.dtype == jnp.bfloat16
    err_bf16 = float(jnp.max(jnp.abs(out_bf16.astype(jnp.float32) - ref_bf16)))
    assert jnp.allclose(out_bf16.astype(jnp.float32), ref_bf16,
                        atol=5e-2, rtol=5e-2), err_bf16

    # --- auto-detected structure (exercises the generation gate) ---
    out_auto = attention(enc_bf16, dec_bf16)
    jax.block_until_ready(out_auto)
    assert jnp.allclose(out_auto.astype(jnp.float32), ref_bf16,
                        atol=5e-2, rtol=5e-2)

    print("KERNEL_OK")
</pallas_src>

<mosaic_0001>
module attributes {stable_mosaic.version = 11 : i64} {
  func.func @_attention_kernel_batched(%arg0: memref<2x8x64xf32, #tpu.memory_space<vmem>>, %arg1: memref<2x8x64xf32, #tpu.memory_space<vmem>>, %arg2: memref<2x8x64xf32, #tpu.memory_space<vmem>>) attributes {dimension_semantics = [], scalar_prefetch = 0 : i64, scratch_operands = 0 : i64, tpu.core_type = #tpu.core_type<tc>} {
    %c0 = arith.constant 0 : index
    %c0_0 = arith.constant 0 : index
    %c0_1 = arith.constant 0 : index
    %0 = vector.load %arg0[%c0, %c0_0, %c0_1] : memref<2x8x64xf32, #tpu.memory_space<vmem>>, vector<2x8x64xf32>
    %c0_2 = arith.constant 0 : index
    %c0_3 = arith.constant 0 : index
    %c0_4 = arith.constant 0 : index
    %1 = vector.load %arg1[%c0_2, %c0_3, %c0_4] : memref<2x8x64xf32, #tpu.memory_space<vmem>>, vector<2x8x64xf32>
    "tpu.trace_start"() <{level = 10 : i32, message = "bqd,bkd->bqk"}> : () -> ()
    %cst = arith.constant dense<0.000000e+00> : vector<2x8x8xf32>
    %2 = tpu.matmul %1, %0, %cst {dimension_numbers = #tpu.dot_dimension_numbers<[2], [2], [1], [1], [0, 0, 0, 1, 1, 1], [0], [0]>} : vector<2x8x64xf32>, vector<2x8x64xf32>, vector<2x8x8xf32> -> vector<2x8x8xf32>
    "tpu.trace_stop"() : () -> ()
    %cst_5 = arith.constant dense<0xFF800000> : vector<2x8xf32>
    %3 = vector.multi_reduction <maximumf>, %2, %cst_5 [2] : vector<2x8x8xf32> to vector<2x8xf32>
    %4 = vector.shape_cast %3 : vector<2x8xf32> to vector<2x8x1xf32>
    %5 = vector.broadcast %4 : vector<2x8x1xf32> to vector<2x8x8xf32>
    %6 = arith.subf %2, %5 : vector<2x8x8xf32>
    %7 = math.exp %6 : vector<2x8x8xf32>
    %cst_6 = arith.constant dense<0.000000e+00> : vector<2x8xf32>
    %8 = vector.multi_reduction <add>, %7, %cst_6 [2] : vector<2x8x8xf32> to vector<2x8xf32>
    %9 = vector.shape_cast %8 : vector<2x8xf32> to vector<2x8x1xf32>
    %10 = tpu.reciprocal %9 {approx = true} : vector<2x8x1xf32> -> vector<2x8x1xf32>
    %11 = vector.broadcast %10 : vector<2x8x1xf32> to vector<2x8x8xf32>
    %12 = arith.mulf %7, %11 : vector<2x8x8xf32>
    "tpu.trace_start"() <{level = 10 : i32, message = "bqk,bkd->bqd"}> : () -> ()
    %cst_7 = arith.constant dense<0.000000e+00> : vector<2x8x64xf32>
    %13 = tpu.matmul %12, %0, %cst_7 {dimension_numbers = #tpu.dot_dimension_numbers<[2], [1], [1], [2], [0, 0, 0, 1, 1, 2], [0], [0]>} : vector<2x8x8xf32>, vector<2x8x64xf32>, vector<2x8x64xf32> -> vector<2x8x64xf32>
    "tpu.trace_stop"() : () -> ()
    %c0_8 = arith.constant 0 : index
    %c0_9 = arith.constant 0 : index
    %c0_10 = arith.constant 0 : index
    %14 = vector.load %arg2[%c0_8, %c0_9, %c0_10] : memref<2x8x64xf32, #tpu.memory_space<vmem>>, vector<2x8x64xf32>
    tpu.vector_store %arg2[%c0_8, %c0_9, %c0_10], %13 {strides = array<i32>} : memref<2x8x64xf32, #tpu.memory_space<vmem>>, vector<2x8x64xf32>,
    return
  }
}

</mosaic_0001>

<llo_original>
// kernel: _attention_impl.1
$region0: #{_attention_impl.1}
  #allocation0 [shape = 'u32[]', space=smem, size = 0x4, offset = 0x4, fixed_abs, tag = 'smem constant byte address 0x4 - core index']
  #allocation1 [shape = 'u32[72,128]{1,0:T(1,128)}', space=vmem, size = 0x9000, scoped, tag = 'internal scratch']
  %s0 = inlined_call_operand.hbm [shape: f32[2,8,64], index: 0, kind: input, shape index: {}]
  %s1 = inlined_call_operand.hbm [shape: f32[2,8,64], index: 1, kind: input, shape index: {}]
  %s2 = inlined_call_operand.hbm [shape: f32[2,8,64], index: 2, kind: output, shape index: {}]
  %s3 = sld [smem:[#allocation0]]
  $region26: #{_attention_impl.1} parent=0
    _
  %s5 = ssub.s32 1, %s3
  %s6 = scalar_select 0, %s5, %s3
  $region1: #{_attention_impl.1} parent=0
    #allocation2 [shape = 'u8[8192]{0}', space=vmem, size = 0x2000, scoped, tag = 'input window, operand 0, single buffered']
    #allocation3 [shape = 's32[1]{0}', space=sflag, size = 0x4, scoped, tag = 'scoped memory for _attention_impl.1']
    #allocation4 [shape = 's32[1]{0}', space=sflag, size = 0x4, scoped, tag = 'scoped memory for _attention_impl.1']
    #allocation5 [shape = 'u8[8192]{0}', space=vmem, size = 0x2000, scoped, tag = 'input window, operand 1, single buffered']
    #allocation6 [shape = 's32[1]{0}', space=sflag, size = 0x4, scoped, tag = 'scoped memory for _attention_impl.1']
    #allocation7 [shape = 'u8[8192]{0}', space=vmem, size = 0x2000, scoped, tag = 'output window, operand 0, single buffered']
    %7 = vsyncpa [#allocation3], 0
    %8 = vsyncpa [#allocation6], 0
    %9 = vsyncpa [#allocation4], 0
    // Predicated region
    $region2: #{_attention_impl.1} parent=1 // pred_check
      _
    $region3: #{_attention_impl.1} parent=1 // pred_check_branch
      %11 = sbr.rel (0) target = $region5
    $region4: #{_attention_impl.1} parent=1 // pred_region
      %13 = vsyncadd [#allocation3], 0
      %s14 = sshll.u32 %s0, 4
      %s15 = int_to_ptr.hbm [resolvable:$true] %s14
      %s16 = sshll.u32 [#allocation2], 4
      %s17 = int_to_ptr.vmem [resolvable:$true] %s16
      %22 = dma.hbm_to_vmem [thread:$0]  %s15, 256, %s17, [#allocation3], 128, 128, 8
    $region5: #{_attention_impl.1} parent=1 // pred_fallthru
      _
    // Predicated region
    $region6: #{_attention_impl.1} parent=1 // pred_check
      _
    $region7: #{_attention_impl.1} parent=1 // pred_check_branch
      %24 = sbr.rel (0) target = $region9
    $region8: #{_attention_impl.1} parent=1 // pred_region
      %26 = vsyncadd [#allocation6], 0
      %s27 = sshll.u32 %s1, 4
      %s28 = int_to_ptr.hbm [resolvable:$true] %s27
      %s29 = sshll.u32 [#allocation5], 4
      %s30 = int_to_ptr.vmem [resolvable:$true] %s29
      %35 = dma.hbm_to_vmem [thread:$0]  %s28, 256, %s30, [#allocation6], 128, 128, 8
    $region9: #{_attention_impl.1} parent=1 // pred_fallthru
      _
    // Predicated region
    $region10: #{_attention_impl.1} parent=1 // pred_check
      _
    $region11: #{_attention_impl.1} parent=1 // pred_check_branch
      %37 = sbr.rel (0) target = $region13
    $region12: #{_attention_impl.1} parent=1 // pred_region
      %39 = dma.done [#allocation3], 256
    $region13: #{_attention_impl.1} parent=1 // pred_fallthru
      _
    // Predicated region
    $region14: #{_attention_impl.1} parent=1 // pred_check
      _
    $region15: #{_attention_impl.1} parent=1 // pred_check_branch
      %41 = sbr.rel (0) target = $region17
    $region16: #{_attention_impl.1} parent=1 // pred_region
      %43 = dma.done [#allocation6], 256
    $region17: #{_attention_impl.1} parent=1 // pred_fallthru
      _
    %v44 = vld [vmem:[#allocation2] sm:$0xff]
    %v45 = vld [vmem:[#allocation2 + $0x8] sm:$0xff]
    %v46 = vld [vmem:[#allocation5] sm:$0xff]
    %v47 = vld [vmem:[#allocation5 + $0x8] sm:$0xff]
    %vm48 = vcmask 523264
    %v50 = vsel %vm48, %v46, 0
    %v53 = vsel %vm48, %v44, 0
    %55 = vmatpush.xpose.msra.mxu0 0.0
    %56 = vmatpush.xpose.msra.mxu0 0.0
    %57 = vmatpush.xpose.msra.mxu0 0.0
    %58 = vmatpush.xpose.msra.mxu0 0.0
    %59 = vmatpush.xpose.msra.mxu0 0.0
    %60 = vmatpush.xpose.msra.mxu0 0.0
    %61 = vmatpush.xpose.msra.mxu0 0.0
    %62 = vmatpush.xpose.msra.mxu0 0.0
    %63 = vmatpush.xpose.msra.mxu0 0.0
    %64 = vmatpush.xpose.msra.mxu0 0.0
    %65 = vmatpush.xpose.msra.mxu0 0.0
    %66 = vmatpush.xpose.msra.mxu0 0.0
    %67 = vmatpush.xpose.msra.mxu0 0.0
    %68 = vmatpush.xpose.msra.mxu0 0.0
    %69 = vmatpush.xpose.msra.mxu0 0.0
    %70 = vmatpush.xpose.msra.mxu0 %v53
    %71 = vmatmul.f32.gmra.mxu0 %v50
    %v72 = vpop.f32.mrf.mxu0
    %v73 = vadd.f32 0.0, %v72
    %74 = vdwg.mxu0
    %v76 = vsel %vm48, %v47, 0
    %v79 = vsel %vm48, %v45, 0
    %81 = vmatpush.xpose.msra.mxu0 0.0
    %82 = vmatpush.xpose.msra.mxu0 0.0
    %83 = vmatpush.xpose.msra.mxu0 0.0
    %84 = vmatpush.xpose.msra.mxu0 0.0
    %85 = vmatpush.xpose.msra.mxu0 0.0
    %86 = vmatpush.xpose.msra.mxu0 0.0
    %87 = vmatpush.xpose.msra.mxu0 0.0
    %88 = vmatpush.xpose.msra.mxu0 0.0
    %89 = vmatpush.xpose.msra.mxu0 0.0
    %90 = vmatpush.xpose.msra.mxu0 0.0
    %91 = vmatpush.xpose.msra.mxu0 0.0
    %92 = vmatpush.xpose.msra.mxu0 0.0
    %93 = vmatpush.xpose.msra.mxu0 0.0
    %94 = vmatpush.xpose.msra.mxu0 0.0
    %95 = vmatpush.xpose.msra.mxu0 0.0
    %96 = vmatpush.xpose.msra.mxu0 %v79
    %97 = vmatmul.f32.gmra.mxu0 %v76
    %v98 = vpop.f32.mrf.mxu0
    %v99 = vadd.f32 0.0, %v98
    %100 = vdwg.mxu0
    %vm101 = vcmask 64512
    %v102 = vsel %vm101, %v73, -inf
    %103 = vmax.xlane.f32.xlu0 %v102
    %v104 = vpop.xlane.xlu0 %103
    %v105 = vsel %vm101, %v99, -inf
    %106 = vmax.xlane.f32.xlu0 %v105
    %v107 = vpop.xlane.xlu0 %106
    %v108 = vsub.f32 %v73, %v104
    %v109 = vsub.f32 %v99, %v107
    %v110 = vmul.f32 %v108, 1.442695
    %v111 = vpow.pop %v110
    %v112 = vmul.f32 %v109, 1.442695
    %v113 = vpow.pop %v112
    %v114 = vsel %vm101, %v111, 0.0
    %115 = vadd.xlane.f32.xlu0 %v114
    %v116 = vpop.xlane.xlu0 %115
    %v117 = vsel %vm101, %v113, 0.0
    %118 = vadd.xlane.f32.xlu0 %v117
    %v119 = vpop.xlane.xlu0 %118
    %v120 = vrcp.pop %v116
    %v121 = vrcp.pop %v119
    %v122 = vmul.f32 %v111, %v120
    %v123 = vmul.f32 %v113, %v121
    %v125 = vsel %vm101, %v122, 0
    %127 = vmatpush.msra.mxu0 0.0
    %128 = vmatpush.msra.mxu0 0.0
    %129 = vmatpush.msra.mxu0 0.0
    %130 = vmatpush.msra.mxu0 0.0
    %131 = vmatpush.msra.mxu0 0.0
    %132 = vmatpush.msra.mxu0 0.0
    %133 = vmatpush.msra.mxu0 0.0
    %134 = vmatpush.msra.mxu0 0.0
    %135 = vmatpush.msra.mxu0 0.0
    %136 = vmatpush.msra.mxu0 0.0
    %137 = vmatpush.msra.mxu0 0.0
    %138 = vmatpush.msra.mxu0 0.0
    %139 = vmatpush.msra.mxu0 0.0
    %140 = vmatpush.msra.mxu0 0.0
    %141 = vmatpush.msra.mxu0 0.0
    %142 = vmatpush.msra.mxu0 %v44
    %143 = vmatmul.f32.gmra.mxu0 %v125
    %v144 = vpop.f32.mrf.mxu0
    %v145 = vadd.f32 0.0, %v144
    %146 = vdwg.mxu0
    %v148 = vsel %vm101, %v123, 0
    %150 = vmatpush.msra.mxu0 0.0
    %151 = vmatpush.msra.mxu0 0.0
    %152 = vmatpush.msra.mxu0 0.0
    %153 = vmatpush.msra.mxu0 0.0
    %154 = vmatpush.msra.mxu0 0.0
    %155 = vmatpush.msra.mxu0 0.0
    %156 = vmatpush.msra.mxu0 0.0
    %157 = vmatpush.msra.mxu0 0.0
    %158 = vmatpush.msra.mxu0 0.0
    %159 = vmatpush.msra.mxu0 0.0
    %160 = vmatpush.msra.mxu0 0.0
    %161 = vmatpush.msra.mxu0 0.0
    %162 = vmatpush.msra.mxu0 0.0
    %163 = vmatpush.msra.mxu0 0.0
    %164 = vmatpush.msra.mxu0 0.0
    %165 = vmatpush.msra.mxu0 %v45
    %166 = vmatmul.f32.gmra.mxu0 %v148
    %v167 = vpop.f32.mrf.mxu0
    %v168 = vadd.f32 0.0, %v167
    %169 = vdwg.mxu0
    %170 = vst.msk [vmem:[#allocation7] sm:$0xff] %vm48, %v145
    %171 = vst.msk [vmem:[#allocation7 + $0x8] sm:$0xff] %vm48, %v168
    // Predicated region
    $region18: #{_attention_impl.1} parent=1 // pred_check
      _
    $region19: #{_attention_impl.1} parent=1 // pred_check_branch
      %173 = sbr.rel (0) target = $region21
    $region20: #{_attention_impl.1} parent=1 // pred_region
      %175 = vsyncadd [#allocation4], 0
      %s176 = sshll.u32 [#allocation7], 4
      %s177 = int_to_ptr.vmem [resolvable:$true] %s176
      %s178 = sshll.u32 %s2, 4
      %s179 = int_to_ptr.hbm [resolvable:$true] %s178
      %184 = dma.vmem_to_hbm [thread:$0]  %s177, 256, %s179, [#allocation4], 128, 128, 8
    $region21: #{_attention_impl.1} parent=1 // pred_fallthru
      _
    // Predicated region
    $region22: #{_attention_impl.1} parent=1 // pred_check
      _
    $region23: #{_attention_impl.1} parent=1 // pred_check_branch
      %186 = sbr.rel (0) target = $region25
    $region24: #{_attention_impl.1} parent=1 // pred_region
      %188 = dma.done [#allocation4], 256
    $region25: #{_attention_impl.1} parent=1 // pred_fallthru
      _
    %189 = vsyncpa [#allocation3], 1
    %190 = vsyncpa [#allocation6], 1
    %191 = vsyncpa [#allocation4], 1

</llo_original>
